<compile_context>
chip_gen: v5e
topology: v5e:2x2
jax: 0.10.0
libtpu: 0.0.40
codegen_flags: <defaults>
</compile_context>

<pallas_src>
import jax
import jax.numpy as jnp
from jax import lax
from jax.experimental import pallas as pl
from jax.experimental.pallas import tpu as pltpu


_MIB = 1024 * 1024


def _round_up(x, m):
    return -(-x // m) * m


def _vmem_capacity_bytes():
    """Physical VMEM of the local chip; conservative 64 MiB (v7x) fallback."""
    try:
        return int(pltpu.get_tpu_info().vmem_capacity_bytes)
    except Exception:
        return 64 * _MIB


def _default_tm():
    """Token rows per grid step: 128 on v5e (128-wide MXU, 16 MiB default scoped VMEM),
    256 on v6e/v7x (matches the 256-wide MXU)."""
    try:
        kind = jax.devices()[0].device_kind.lower()
    except Exception:
        kind = ""
    if "v5 lite" in kind or "v5e" in kind or "v5lite" in kind:
        return 128
    return 256


def _resident_spec(shape, whole_array):
    """Spec for an operand that must stay fully in VMEM for the whole kernel.

    whole_array=True : memory_space=VMEM, untiled -> exactly one VMEM copy.
    whole_array=False: full-array block with a constant index map (fallback; the
                       pipeline may double-buffer it -- vmem_limit budgets for that)."""
    if whole_array:
        return pl.BlockSpec(memory_space=pltpu.MemorySpace.VMEM)
    nd = len(shape)
    return pl.BlockSpec(shape, lambda *_: (0,) * nd)


def _call_with_resident_fallback(run):
    try:
        return run(True)
    except Exception:  # pragma: no cover - fall back to constant-index blocked specs
        return run(False)


# ------------------------- resident (VMEM table) kernels -------------------------


def _onehot(ids_col, vocab, dtype):
    """(tm, 1) int32 ids -> (tm, vocab) one-hot.  Pure compare + cast (no f32 select)."""
    col = lax.broadcasted_iota(jnp.int32, (ids_col.shape[0], vocab), 1)
    return (col == ids_col).astype(dtype)


def _gather_kernel(ids_ref, table_ref, out_ref):
    """out[t, :] = table[ids[t], :] as a one-hot MXU matmul (full-tile lane-dense store)."""
    # TODO(synk): for vocab >> d_out benchmark jnp.take on the VMEM-resident table
    # against this one-hot matmul (frees the MXU entirely).
    onehot = _onehot(ids_ref[...], table_ref.shape[0], table_ref.dtype)
    out_ref[...] = jnp.dot(
        onehot, table_ref[...], preferred_element_type=jnp.float32
    ).astype(out_ref.dtype)


def _gather_proj_kernel(ids_ref, emb_ref, w_ref, out_ref):
    """out[t, :] = emb[ids[t], :] @ W ; both matmuls on the MXU, f32 accumulation."""
    onehot = _onehot(ids_ref[...], emb_ref.shape[0], emb_ref.dtype)
    gathered = jnp.dot(onehot, emb_ref[...], preferred_element_type=jnp.float32)
    out_ref[...] = jnp.dot(
        gathered.astype(w_ref.dtype), w_ref[...], preferred_element_type=jnp.float32
    ).astype(out_ref.dtype)


# ------------------------- HBM DMA-gather kernels -------------------------


def _issue_row_gather(ids_ref, table_ref, buf_ref, sem_ref, step, slot, tm):
    """Start tm row DMAs  table[ids[step*tm + t]] -> buf[slot, t]  on sem[slot]."""
    base = step * tm

    def body(t, carry):
        row = ids_ref[base + t]
        pltpu.make_async_copy(
            table_ref.at[pl.ds(row, 1)],
            buf_ref.at[slot, pl.ds(t, 1)],
            sem_ref.at[slot],
        ).start()
        return carry

    lax.fori_loop(0, tm, body, 0)


def _wait_row_gather(table_ref, buf_ref, sem_ref, slot, tm):
    """Wait for the tm row DMAs previously issued into buf[slot] (one wait per row)."""

    def body(t, carry):
        pltpu.make_async_copy(
            table_ref.at[pl.ds(0, 1)],
            buf_ref.at[slot, pl.ds(t, 1)],
            sem_ref.at[slot],
        ).wait()
        return carry

    lax.fori_loop(0, tm, body, 0)


def _gathered_rows(ids_ref, table_ref, buf_ref, sem_ref, tm):
    """2-slot double-buffered DMA gather.

    Issues step i+1's row copies before waiting on step i's, so the HBM gather of the
    next tile overlaps this tile's compute and writeback.  Requires the grid axis to be
    sequential ("arbitrary") since DMA state is carried across steps."""
    i = pl.program_id(0)
    nsteps = pl.num_programs(0)
    slot = lax.rem(i, 2)

    @pl.when(i == 0)
    def _():
        _issue_row_gather(ids_ref, table_ref, buf_ref, sem_ref, i, slot, tm)

    @pl.when(i + 1 < nsteps)
    def _():
        _issue_row_gather(ids_ref, table_ref, buf_ref, sem_ref, i + 1, 1 - slot, tm)

    _wait_row_gather(table_ref, buf_ref, sem_ref, slot, tm)
    return buf_ref[slot]


def _hbm_gather_kernel(ids_ref, table_ref, out_ref, buf_ref, sem_ref):
    rows = _gathered_rows(ids_ref, table_ref, buf_ref, sem_ref, out_ref.shape[0])
    out_ref[...] = rows.astype(out_ref.dtype)


def _hbm_gather_proj_kernel(ids_ref, table_ref, w_ref, out_ref, buf_ref, sem_ref):
    rows = _gathered_rows(ids_ref, table_ref, buf_ref, sem_ref, out_ref.shape[0])
    out_ref[...] = jnp.dot(
        rows.astype(w_ref.dtype), w_ref[...], preferred_element_type=jnp.float32
    ).astype(out_ref.dtype)


# ------------------------- wrapper -------------------------


def embedding_forward(ids, emb_table, proj_wt=None, *, tm=None,
                      param_dtype=jnp.bfloat16, out_dtype=jnp.float32,
                      force_hbm_gather=False):
    """Forward pass of the implicit_llm `Embedding` module.

    ids:       (batch, seq) integer token ids.
    emb_table: (vocab, d_embed) f32  -- nn.Embedding(vocab, d_embed).weight.
    proj_wt:   (d_embed, d_model) f32 -- nn.Linear(..., bias=False).weight.T, or None.
    Returns (batch, seq, d_out) in `out_dtype`.
    """
    batch, seq = ids.shape
    vocab, d_embed = emb_table.shape
    d_out = d_embed if proj_wt is None else proj_wt.shape[1]
    n = batch * seq

    if tm is None:
        tm = _default_tm()
    tm = max(8, min(_round_up(tm, 8), _round_up(n, 8)))
    n_pad = _round_up(n, tm)
    grid = (n_pad // tm,)

    # Clamp ids (PyTorch raises on OOB; we clamp so the DMA gather never reads OOB),
    # pad the tail with id 0.
    flat_ids = jnp.zeros((n_pad,), jnp.int32).at[:n].set(
        jnp.clip(ids.reshape(-1).astype(jnp.int32), 0, vocab - 1))

    vmem_cap = _vmem_capacity_bytes()
    resident_budget = vmem_cap // 2   # leave headroom for pipeline buffers / temporaries
    pbytes = jnp.dtype(param_dtype).itemsize
    obytes = jnp.dtype(out_dtype).itemsize
    tbytes = jnp.dtype(emb_table.dtype).itemsize

    def fused_bytes(cols):
        # resident table + one-hot temp + f32 matmul temp + double-buffered out + ids
        return (vocab * cols * pbytes + tm * vocab * pbytes + tm * cols * 4
                + 2 * tm * cols * obytes + 4 * tm * 4)

    def chained_bytes():
        return (vocab * d_embed * pbytes + d_embed * d_out * pbytes
                + tm * vocab * pbytes + tm * d_embed * 4 + tm * d_out * 4
                + 2 * tm * d_out * obytes + 4 * tm * 4)

    def hbm_bytes():
        b = 2 * tm * d_embed * tbytes + 2 * tm * d_out * obytes + tm * d_out * 4
        if proj_wt is not None:
            b += d_embed * d_out * pbytes + tm * d_embed * pbytes
        return b

    # --- choose the execution path ---
    if force_hbm_gather:
        mode = "hbm"
    elif proj_wt is None:
        mode = "fused" if fused_bytes(d_embed) <= resident_budget else "hbm"
    else:
        # Pre-fusing emb @ W in XLA pays off when it reduces the one-hot matmul's
        # per-token MACs AND the fused (vocab, d_model) table still fits in VMEM.
        fuse_cheaper = vocab * d_out <= vocab * d_embed + d_embed * d_out
        if fuse_cheaper and fused_bytes(d_out) <= resident_budget:
            mode = "fused"
        elif chained_bytes() <= resident_budget:
            mode = "chained"
        else:
            mode = "hbm"

    def vmem_limit(est):
        return int(min(int(0.92 * vmem_cap), max(est + 4 * _MIB, 32 * _MIB)))

    out_shape = jax.ShapeDtypeStruct((n_pad, d_out), out_dtype)

    if mode in ("fused", "chained"):
        ids_2d = flat_ids.reshape(n_pad, 1)
        ids_spec = pl.BlockSpec((tm, 1), lambda i: (i, 0))
        out_spec = pl.BlockSpec((tm, d_out), lambda i: (i, 0))

        if mode == "fused":
            if proj_wt is None:
                table = emb_table.astype(param_dtype)
            else:
                # One XLA matmul amortized over the batch; the kernel is a pure gather.
                table = jnp.dot(emb_table, proj_wt,
                                preferred_element_type=jnp.float32).astype(param_dtype)
            est = fused_bytes(d_out)

            def run(whole_array):
                return pl.pallas_call(
                    _gather_kernel,
                    out_shape=out_shape,
                    grid=grid,
                    in_specs=[ids_spec,
                              _resident_spec((vocab, d_out), whole_array)],
                    out_specs=out_spec,
                    compiler_params=pltpu.CompilerParams(
                        dimension_semantics=("parallel",),
                        vmem_limit_bytes=vmem_limit(est + vocab * d_out * pbytes)),
                )(ids_2d, table)
        else:  # chained: gather then project, both on the MXU
            est = chained_bytes()

            def run(whole_array):
                return pl.pallas_call(
                    _gather_proj_kernel,
                    out_shape=out_shape,
                    grid=grid,
                    in_specs=[ids_spec,
                              _resident_spec((vocab, d_embed), whole_array),
                              _resident_spec((d_embed, d_out), whole_array)],
                    out_specs=out_spec,
                    compiler_params=pltpu.CompilerParams(
                        dimension_semantics=("parallel",),
                        vmem_limit_bytes=vmem_limit(
                            est + (vocab * d_embed + d_embed * d_out) * pbytes)),
                )(ids_2d, emb_table.astype(param_dtype), proj_wt.astype(param_dtype))

        out = _call_with_resident_fallback(run)

    else:  # mode == "hbm": DMA row gather from the HBM-resident f32 table
        # TODO(synk): on v7x, add a leading core-parallel axis that splits the token
        # range across the two TensorCores (each with its own 2-slot gather pipeline).
        est = hbm_bytes()
        cp = pltpu.CompilerParams(
            # The grid axis carries cross-step DMA state (prefetch of step i+1),
            # so it must stay sequential.
            dimension_semantics=("arbitrary",),
            vmem_limit_bytes=vmem_limit(est + d_embed * d_out * pbytes))
        scratch = [pltpu.VMEM((2, tm, d_embed), emb_table.dtype),
                   pltpu.SemaphoreType.DMA((2,))]
        out_spec = pl.BlockSpec((tm, d_out), lambda i, *_: (i, 0))

        if proj_wt is None:
            def run(whole_array):
                del whole_array
                gs = pltpu.PrefetchScalarGridSpec(
                    num_scalar_prefetch=1, grid=grid,
                    in_specs=[pl.BlockSpec(memory_space=pl.ANY)],
                    out_specs=out_spec, scratch_shapes=scratch)
                return pl.pallas_call(
                    _hbm_gather_kernel, out_shape=out_shape,
                    grid_spec=gs, compiler_params=cp,
                )(flat_ids, emb_table)
        else:
            def run(whole_array):
                gs = pltpu.PrefetchScalarGridSpec(
                    num_scalar_prefetch=1, grid=grid,
                    in_specs=[pl.BlockSpec(memory_space=pl.ANY),
                              _resident_spec((d_embed, d_out), whole_array)],
                    out_specs=out_spec, scratch_shapes=scratch)
                return pl.pallas_call(
                    _hbm_gather_proj_kernel, out_shape=out_shape,
                    grid_spec=gs, compiler_params=cp,
                )(flat_ids, emb_table, proj_wt.astype(param_dtype))

        out = _call_with_resident_fallback(run)

    return out[:n].reshape(batch, seq, d_out)


def _reference(ids, emb_table, proj_wt):
    x = jnp.take(emb_table, ids, axis=0)
    if proj_wt is not None:
        x = x @ proj_wt
    return x


if __name__ == "__main__":
    key = jax.random.PRNGKey(0)

    # (vocab, d_embed, d_model, batch, seq, out_dtype, force_hbm_gather)
    configs = [
        (64, 128, 256, 2, 8, jnp.float32, False),      # resident, XLA-prefused table
        (512, 128, 256, 2, 200, jnp.float32, False),   # resident, gather+proj, multi-step
        (96, 128, 128, 2, 8, jnp.bfloat16, False),     # no projection, bf16 output
        (1024, 128, 128, 2, 192, jnp.float32, True),   # HBM DMA-gather path (no proj)
        (1024, 128, 256, 2, 192, jnp.float32, True),   # HBM DMA-gather + resident proj
    ]

    for cfg_idx, (vocab, d_embed, d_model, batch, seq, out_dtype, force_hbm) \
            in enumerate(configs):
        key, k_ids, k_emb, k_proj = jax.random.split(key, 4)

        # PyTorch-shaped params:
        #   nn.Embedding(vocab, d_embed).weight               -> (vocab, d_embed)
        #   nn.Linear(d_embed, d_model, bias=False).weight^T  -> (d_embed, d_model)
        emb_table = jax.random.normal(k_emb, (vocab, d_embed), dtype=jnp.float32)
        if d_model != d_embed:
            bound = 1.0 / (d_embed ** 0.5)
            proj_wt = jax.random.uniform(
                k_proj, (d_embed, d_model), dtype=jnp.float32,
                minval=-bound, maxval=bound)
        else:
            proj_wt = None

        ids = jax.random.randint(k_ids, (batch, seq), 0, vocab, dtype=jnp.int32)

        out = jax.block_until_ready(
            embedding_forward(ids, emb_table, proj_wt,
                              out_dtype=out_dtype, force_hbm_gather=force_hbm))
        d_out = d_model if proj_wt is not None else d_embed
        assert out.shape == (batch, seq, d_out), (cfg_idx, out.shape)
        assert out.dtype == jnp.dtype(out_dtype), (cfg_idx, out.dtype)

        ref = _reference(ids, emb_table, proj_wt)
        # bf16 params / bf16 output round-trip; f32 accumulation everywhere.
        ok = jnp.allclose(out.astype(jnp.float32), ref, atol=3e-2, rtol=3e-2)
        assert ok, (cfg_idx, float(jnp.max(jnp.abs(out.astype(jnp.float32) - ref))))

    print("KERNEL_OK")
</pallas_src>

<mosaic_0001>
module attributes {stable_mosaic.version = 11 : i64} {
  func.func @_gather_kernel(%arg0: i32, %arg1: memref<16x1xi32, #tpu.memory_space<vmem>>, %arg2: memref<64x256xbf16, #tpu.memory_space<vmem>>, %arg3: memref<16x256xf32, #tpu.memory_space<vmem>>) attributes {dimension_semantics = [#tpu.dimension_semantics<parallel>], iteration_bounds = array<i64: 1>, scalar_prefetch = 0 : i64, scratch_operands = 0 : i64, tpu.core_type = #tpu.core_type<tc>, window_params = [{transform_indices = @transform_0, window_bounds = array<i64: 16, 1>}, {pipeline_mode = #tpu.pipeline_mode<synchronous>, transform_indices = @transform_1, window_bounds = array<i64: 64, 256>}, {transform_indices = @transform_2, window_bounds = array<i64: 16, 256>}]} {
    %c0 = arith.constant 0 : index
    %c0_0 = arith.constant 0 : index
    %0 = vector.load %arg1[%c0, %c0_0] : memref<16x1xi32, #tpu.memory_space<vmem>>, vector<16x1xi32>
    %1 = tpu.iota {dimensions = array<i32: 1>} : vector<16x64xi32>
    %2 = vector.broadcast %0 : vector<16x1xi32> to vector<16x64xi32>
    %3 = arith.cmpi eq, %1, %2 : vector<16x64xi32>
    %4 = arith.extui %3 : vector<16x64xi1> to vector<16x64xi32>
    %5 = arith.sitofp %4 : vector<16x64xi32> to vector<16x64xf32>
    %6 = arith.truncf %5 : vector<16x64xf32> to vector<16x64xbf16>
    %c0_1 = arith.constant 0 : index
    %c0_2 = arith.constant 0 : index
    %7 = vector.load %arg2[%c0_1, %c0_2] : memref<64x256xbf16, #tpu.memory_space<vmem>>, vector<64x256xbf16>
    %cst = arith.constant dense<0.000000e+00> : vector<16x256xf32>
    %8 = tpu.matmul %6, %7, %cst {dimension_numbers = #tpu.dot_dimension_numbers<[1], [0], [0], [1], [0, 0, 1, 1], [], []>} : vector<16x64xbf16>, vector<64x256xbf16>, vector<16x256xf32> -> vector<16x256xf32>
    %c0_3 = arith.constant 0 : index
    %c0_4 = arith.constant 0 : index
    %9 = vector.load %arg3[%c0_3, %c0_4] : memref<16x256xf32, #tpu.memory_space<vmem>>, vector<16x256xf32>
    tpu.vector_store %arg3[%c0_3, %c0_4], %8 {strides = array<i32>} : memref<16x256xf32, #tpu.memory_space<vmem>>, vector<16x256xf32>,
    return
  }
  func.func @transform_0(%arg0: i32) -> (i32, i32) {
    %c0_i32 = arith.constant 0 : i32
    %c0_i32_0 = arith.constant 0 : i32
    return %arg0, %c0_i32 : i32, i32
  }
  func.func @transform_1(%arg0: i32) -> (i32, i32) {
    %c0_i32 = arith.constant 0 : i32
    %c0_i32_0 = arith.constant 0 : i32
    %c0_i32_1 = arith.constant 0 : i32
    return %c0_i32, %c0_i32_0 : i32, i32
  }
  func.func @transform_2(%arg0: i32) -> (i32, i32) {
    %c0_i32 = arith.constant 0 : i32
    %c0_i32_0 = arith.constant 0 : i32
    return %arg0, %c0_i32 : i32, i32
  }
}

module attributes {stable_mosaic.version = 11 : i64} {
  func.func @_gather_kernel(%arg0: i32, %arg1: memref<16x1xi32, #tpu.memory_space<vmem>>, %arg2: memref<64x256xbf16, #tpu.memory_space<vmem>>, %arg3: memref<16x256xf32, #tpu.memory_space<vmem>>) attributes {dimension_semantics = [#tpu.dimension_semantics<parallel>], iteration_bounds = array<i64: 1>, scalar_prefetch = 0 : i64, scratch_operands = 0 : i64, tpu.core_type = #tpu.core_type<tc>, window_params = [{transform_indices = @transform_0, window_bounds = array<i64: 16, 1>}, {pipeline_mode = #tpu.pipeline_mode<synchronous>, transform_indices = @transform_1, window_bounds = array<i64: 64, 256>}, {transform_indices = @transform_2, window_bounds = array<i64: 16, 256>}]} {
    %c0 = arith.constant 0 : index
    %c0_0 = arith.constant 0 : index
    %0 = vector.load %arg1[%c0, %c0_0] : memref<16x1xi32, #tpu.memory_space<vmem>>, vector<16x1xi32>
    %1 = tpu.iota {dimensions = array<i32: 1>} : vector<16x64xi32>
    %2 = vector.broadcast %0 : vector<16x1xi32> to vector<16x64xi32>
    %3 = arith.cmpi eq, %1, %2 : vector<16x64xi32>
    %4 = arith.extui %3 : vector<16x64xi1> to vector<16x64xi32>
    %5 = arith.sitofp %4 : vector<16x64xi32> to vector<16x64xf32>
    %6 = arith.truncf %5 : vector<16x64xf32> to vector<16x64xbf16>
    %c0_1 = arith.constant 0 : index
    %c0_2 = arith.constant 0 : index
    %7 = vector.load %arg2[%c0_1, %c0_2] : memref<64x256xbf16, #tpu.memory_space<vmem>>, vector<64x256xbf16>
    %cst = arith.constant dense<0.000000e+00> : vector<16x256xf32>
    %8 = tpu.matmul %6, %7, %cst {dimension_numbers = #tpu.dot_dimension_numbers<[1], [0], [0], [1], [0, 0, 1, 1], [], []>} : vector<16x64xbf16>, vector<64x256xbf16>, vector<16x256xf32> -> vector<16x256xf32>
    %c0_3 = arith.constant 0 : index
    %c0_4 = arith.constant 0 : index
    %9 = vector.load %arg3[%c0_3, %c0_4] : memref<16x256xf32, #tpu.memory_space<vmem>>, vector<16x256xf32>
    tpu.vector_store %arg3[%c0_3, %c0_4], %8 {strides = array<i32>} : memref<16x256xf32, #tpu.memory_space<vmem>>, vector<16x256xf32>,
    return
  }
  func.func @transform_0(%arg0: i32) -> (i32, i32) {
    %c0_i32 = arith.constant 0 : i32
    %c0_i32_0 = arith.constant 0 : i32
    return %arg0, %c0_i32 : i32, i32
  }
  func.func @transform_1(%arg0: i32) -> (i32, i32) {
    %c0_i32 = arith.constant 0 : i32
    %c0_i32_0 = arith.constant 0 : i32
    %c0_i32_1 = arith.constant 0 : i32
    return %c0_i32, %c0_i32_0 : i32, i32
  }
  func.func @transform_2(%arg0: i32) -> (i32, i32) {
    %c0_i32 = arith.constant 0 : i32
    %c0_i32_0 = arith.constant 0 : i32
    return %arg0, %c0_i32 : i32, i32
  }
}

</mosaic_0001>

<llo_original>
// kernel: tpu_custom_call.1
$region0: #{tpu_custom_call.1}
  #allocation0 [shape = 'u32[]', space=smem, size = 0x4, offset = 0x4, fixed_abs, tag = 'smem constant byte address 0x4 - core index']
  #allocation1 [shape = 'u32[72,128]{1,0:T(1,128)}', space=vmem, size = 0x9000, scoped, tag = 'internal scratch']
  %s0 = inlined_call_operand.vmem [shape: s32[16,1], index: 0, kind: input, shape index: {}]
  %s1 = inlined_call_operand.hbm [shape: bf16[64,256], index: 1, kind: input, shape index: {}]
  %s2 = inlined_call_operand.hbm [shape: f32[16,256], index: 2, kind: output, shape index: {}]
  %s3 = sld [smem:[#allocation0]]
  $region22: #{tpu_custom_call.1} parent=0
    _
  %s5 = ssub.s32 1, %s3
  %s6 = scalar_select 0, %s5, %s3
  $region1: #{tpu_custom_call.1} parent=0
    #allocation2 [shape = 'u8[32768]{0}', space=vmem, size = 0x8000, scoped, tag = 'input window, operand 1, single buffered']
    #allocation3 [shape = 's32[1]{0}', space=sflag, size = 0x4, scoped, tag = 'scoped memory for tpu_custom_call.1']
    #allocation4 [shape = 's32[1]{0}', space=sflag, size = 0x4, scoped, tag = 'scoped memory for tpu_custom_call.1']
    #allocation5 [shape = 'u8[16384]{0}', space=vmem, size = 0x4000, scoped, tag = 'output window, operand 0, single buffered']
    %7 = vsyncpa [#allocation3], 0
    %8 = vsyncpa [#allocation4], 0
    // Predicated region
    $region2: #{tpu_custom_call.1} parent=1 // pred_check
      _
    $region3: #{tpu_custom_call.1} parent=1 // pred_check_branch
      %10 = sbr.rel (0) target = $region5
    $region4: #{tpu_custom_call.1} parent=1 // pred_region
      _
    $region5: #{tpu_custom_call.1} parent=1 // pred_fallthru
      _
    // Predicated region
    $region6: #{tpu_custom_call.1} parent=1 // pred_check
      _
    $region7: #{tpu_custom_call.1} parent=1 // pred_check_branch
      %12 = sbr.rel (0) target = $region9
    $region8: #{tpu_custom_call.1} parent=1 // pred_region
      %14 = vsyncadd [#allocation3], 0
      %s15 = sshll.u32 %s1, 4
      %s16 = int_to_ptr.hbm [resolvable:$true] %s15
      %s17 = sshll.u32 [#allocation2], 4
      %s18 = int_to_ptr.vmem [resolvable:$true] %s17
      %23 = dma.hbm_to_vmem [thread:$0]  %s16, 1024, %s18, [#allocation3], 128, 128, 8
    $region9: #{tpu_custom_call.1} parent=1 // pred_fallthru
      _
    // Predicated region
    $region10: #{tpu_custom_call.1} parent=1 // pred_check
      _
    $region11: #{tpu_custom_call.1} parent=1 // pred_check_branch
      %25 = sbr.rel (0) target = $region13
    $region12: #{tpu_custom_call.1} parent=1 // pred_region
      %27 = dma.done [#allocation3], 1024
    $region13: #{tpu_custom_call.1} parent=1 // pred_fallthru
      _
    %v29 = vld [vmem:[%s0] sm:$0xff]
    %v30 = vld [vmem:[%s0 + $0x8] sm:$0xff]
    %v31 = vlaneseq
    %v32 = vand.u32 %v31, 127
    %33 = vset.pattern.permute.xlu0 0
    %34 = vperm.xlu0 %33, %v29
    %v35 = vpop.permute.xlu0 %34
    %36 = vset.pattern.permute.xlu0 0
    %37 = vperm.xlu0 %36, %v30
    %v38 = vpop.permute.xlu0 %37
    %vm39 = vcmp.eq.s32.totalorder %v32, %v35
    %vm40 = vcmp.eq.s32.totalorder %v32, %v38
    %v41 = vsel %vm39, 1, 0
    %v42 = vsel %vm40, 1, 0
    %v43 = vcvt.s32.f32 %v41
    %v44 = vcvt.s32.f32 %v42
    %v45 = vpack.c.bf16 %v44, %v43
    %v46 = vld [vmem:[#allocation2] sm:$0xff]
    %v47 = vld [vmem:[#allocation2 + $0x8] sm:$0xff]
    %v48 = vld [vmem:[#allocation2 + $0x10] sm:$0xff]
    %v49 = vld [vmem:[#allocation2 + $0x18] sm:$0xff]
    %v50 = vld [vmem:[#allocation2 + $0x20] sm:$0xff]
    %v51 = vld [vmem:[#allocation2 + $0x28] sm:$0xff]
    %v52 = vld [vmem:[#allocation2 + $0x30] sm:$0xff]
    %v53 = vld [vmem:[#allocation2 + $0x38] sm:$0xff]
    %v62 = vunpack.c.l.b16 %v46
    %v63 = vunpack.c.h.b16 %v46
    %v64 = vunpack.c.l.b16 %v47
    %v65 = vunpack.c.h.b16 %v47
    %v66 = vunpack.c.l.b16 %v48
    %v67 = vunpack.c.h.b16 %v48
    %v68 = vunpack.c.l.b16 %v49
    %v69 = vunpack.c.h.b16 %v49
    %v70 = vunpack.c.l.b16 %v50
    %v71 = vunpack.c.h.b16 %v50
    %v72 = vunpack.c.l.b16 %v51
    %v73 = vunpack.c.h.b16 %v51
    %v74 = vunpack.c.l.b16 %v52
    %v75 = vunpack.c.h.b16 %v52
    %v76 = vunpack.c.l.b16 %v53
    %v77 = vunpack.c.h.b16 %v53
    %v78 = vpack.c.b16 %v64, %v62
    %v79 = vpack.c.b16 %v65, %v63
    %v80 = vpack.c.b16 %v68, %v66
    %v81 = vpack.c.b16 %v69, %v67
    %v82 = vpack.c.b16 %v72, %v70
    %v83 = vpack.c.b16 %v73, %v71
    %v84 = vpack.c.b16 %v76, %v74
    %v85 = vpack.c.b16 %v77, %v75
    %vm94 = vcmask 523264
    %v96 = vsel %vm94, %v45, 0
    %98 = vmatpush.bf16.msra.mxu0 0
    %99 = vmatpush.bf16.msra.mxu0 0
    %100 = vmatpush.bf16.msra.mxu0 0
    %101 = vmatpush.bf16.msra.mxu0 0
    %102 = vmatpush.bf16.msra.mxu0 %v84
    %103 = vmatpush.bf16.msra.mxu0 %v82
    %104 = vmatpush.bf16.msra.mxu0 %v80
    %105 = vmatpush.bf16.msra.mxu0 %v78
    %106 = vmatmul.bf16.gmra.mxu0 %v96
    %v107 = vpop.f32.mrf.mxu0
    %v108 = vadd.f32 0.0, %v107
    %v109 = vpop.f32.mrf.mxu0
    %v110 = vadd.f32 0.0, %v109
    %111 = vdwg.mxu0
    %112 = vmatpush.bf16.msra.mxu0 0
    %113 = vmatpush.bf16.msra.mxu0 0
    %114 = vmatpush.bf16.msra.mxu0 0
    %115 = vmatpush.bf16.msra.mxu0 0
    %116 = vmatpush.bf16.msra.mxu0 %v85
    %117 = vmatpush.bf16.msra.mxu0 %v83
    %118 = vmatpush.bf16.msra.mxu0 %v81
    %119 = vmatpush.bf16.msra.mxu0 %v79
    %120 = vmatmul.bf16.gmra.mxu0 %v96
    %v121 = vpop.f32.mrf.mxu0
    %v122 = vadd.f32 0.0, %v121
    %v123 = vpop.f32.mrf.mxu0
    %v124 = vadd.f32 0.0, %v123
    %125 = vdwg.mxu0
    %126 = vst [vmem:[#allocation5] sm:$0xff] %v108
    %127 = vst [vmem:[#allocation5 + $0x8] sm:$0xff] %v122
    %128 = vst [vmem:[#allocation5 + $0x10] sm:$0xff] %v110
    %129 = vst [vmem:[#allocation5 + $0x18] sm:$0xff] %v124
    // Predicated region
    $region14: #{tpu_custom_call.1} parent=1 // pred_check
      _
    $region15: #{tpu_custom_call.1} parent=1 // pred_check_branch
      %131 = sbr.rel (0) target = $region17
    $region16: #{tpu_custom_call.1} parent=1 // pred_region
      %133 = vsyncadd [#allocation4], 0
      %s134 = sshll.u32 [#allocation5], 4
      %s135 = int_to_ptr.vmem [resolvable:$true] %s134
      %s136 = sshll.u32 %s2, 4
      %s137 = int_to_ptr.hbm [resolvable:$true] %s136
      %142 = dma.vmem_to_hbm [thread:$0]  %s135, 512, %s137, [#allocation4], 256, 256, 16
    $region17: #{tpu_custom_call.1} parent=1 // pred_fallthru
      _
    // Predicated region
    $region18: #{tpu_custom_call.1} parent=1 // pred_check
      _
    $region19: #{tpu_custom_call.1} parent=1 // pred_check_branch
      %144 = sbr.rel (0) target = $region21
    $region20: #{tpu_custom_call.1} parent=1 // pred_region
      %146 = dma.done [#allocation4], 512
    $region21: #{tpu_custom_call.1} parent=1 // pred_fallthru
      _
    %147 = vsyncpa [#allocation3], 1
    %148 = vsyncpa [#allocation4], 1

// kernel: tpu_custom_call.1
$region0: #{tpu_custom_call.1}
  #allocation0 [shape = 'u32[]', space=smem, size = 0x4, offset = 0x4, fixed_abs, tag = 'smem constant byte address 0x4 - core index']
  #allocation1 [shape = 'u32[72,128]{1,0:T(1,128)}', space=vmem, size = 0x9000, scoped, tag = 'internal scratch']
  %s0 = inlined_call_operand.vmem [shape: s32[16,1], index: 0, kind: input, shape index: {}]
  %s1 = inlined_call_operand.hbm [shape: bf16[64,256], index: 1, kind: input, shape index: {}]
  %s2 = inlined_call_operand.hbm [shape: f32[16,256], index: 2, kind: output, shape index: {}]
  %s3 = sld [smem:[#allocation0]]
  $region22: #{tpu_custom_call.1} parent=0
    _
  %s5 = ssub.s32 1, %s3
  %s6 = scalar_select 0, %s5, %s3
  $region1: #{tpu_custom_call.1} parent=0
    #allocation2 [shape = 'u8[32768]{0}', space=vmem, size = 0x8000, scoped, tag = 'input window, operand 1, single buffered']
    #allocation3 [shape = 's32[1]{0}', space=sflag, size = 0x4, scoped, tag = 'scoped memory for tpu_custom_call.1']
    #allocation4 [shape = 's32[1]{0}', space=sflag, size = 0x4, scoped, tag = 'scoped memory for tpu_custom_call.1']
    #allocation5 [shape = 'u8[16384]{0}', space=vmem, size = 0x4000, scoped, tag = 'output window, operand 0, single buffered']
    %7 = vsyncpa [#allocation3], 0
    %8 = vsyncpa [#allocation4], 0
    // Predicated region
    $region2: #{tpu_custom_call.1} parent=1 // pred_check
      _
    $region3: #{tpu_custom_call.1} parent=1 // pred_check_branch
      %10 = sbr.rel (0) target = $region5
    $region4: #{tpu_custom_call.1} parent=1 // pred_region
      _
    $region5: #{tpu_custom_call.1} parent=1 // pred_fallthru
      _
    // Predicated region
    $region6: #{tpu_custom_call.1} parent=1 // pred_check
      _
    $region7: #{tpu_custom_call.1} parent=1 // pred_check_branch
      %12 = sbr.rel (0) target = $region9
    $region8: #{tpu_custom_call.1} parent=1 // pred_region
      %14 = vsyncadd [#allocation3], 0
      %s15 = sshll.u32 %s1, 4
      %s16 = int_to_ptr.hbm [resolvable:$true] %s15
      %s17 = sshll.u32 [#allocation2], 4
      %s18 = int_to_ptr.vmem [resolvable:$true] %s17
      %23 = dma.hbm_to_vmem [thread:$0]  %s16, 1024, %s18, [#allocation3], 128, 128, 8
    $region9: #{tpu_custom_call.1} parent=1 // pred_fallthru
      _
    // Predicated region
    $region10: #{tpu_custom_call.1} parent=1 // pred_check
      _
    $region11: #{tpu_custom_call.1} parent=1 // pred_check_branch
      %25 = sbr.rel (0) target = $region13
    $region12: #{tpu_custom_call.1} parent=1 // pred_region
      %27 = dma.done [#allocation3], 1024
    $region13: #{tpu_custom_call.1} parent=1 // pred_fallthru
      _
    %v29 = vld [vmem:[%s0] sm:$0xff]
    %v30 = vld [vmem:[%s0 + $0x8] sm:$0xff]
    %v31 = vlaneseq
    %v32 = vand.u32 %v31, 127
    %33 = vset.pattern.permute.xlu0 0
    %34 = vperm.xlu0 %33, %v29
    %v35 = vpop.permute.xlu0 %34
    %36 = vset.pattern.permute.xlu0 0
    %37 = vperm.xlu0 %36, %v30
    %v38 = vpop.permute.xlu0 %37
    %vm39 = vcmp.eq.s32.totalorder %v32, %v35
    %vm40 = vcmp.eq.s32.totalorder %v32, %v38
    %v41 = vsel %vm39, 1, 0
    %v42 = vsel %vm40, 1, 0
    %v43 = vcvt.s32.f32 %v41
    %v44 = vcvt.s32.f32 %v42
    %v45 = vpack.c.bf16 %v44, %v43
    %v46 = vld [vmem:[#allocation2] sm:$0xff]
    %v47 = vld [vmem:[#allocation2 + $0x8] sm:$0xff]
    %v48 = vld [vmem:[#allocation2 + $0x10] sm:$0xff]
    %v49 = vld [vmem:[#allocation2 + $0x18] sm:$0xff]
    %v50 = vld [vmem:[#allocation2 + $0x20] sm:$0xff]
    %v51 = vld [vmem:[#allocation2 + $0x28] sm:$0xff]
    %v52 = vld [vmem:[#allocation2 + $0x30] sm:$0xff]
    %v53 = vld [vmem:[#allocation2 + $0x38] sm:$0xff]
    %v62 = vunpack.c.l.b16 %v46
    %v63 = vunpack.c.h.b16 %v46
    %v64 = vunpack.c.l.b16 %v47
    %v65 = vunpack.c.h.b16 %v47
    %v66 = vunpack.c.l.b16 %v48
    %v67 = vunpack.c.h.b16 %v48
    %v68 = vunpack.c.l.b16 %v49
    %v69 = vunpack.c.h.b16 %v49
    %v70 = vunpack.c.l.b16 %v50
    %v71 = vunpack.c.h.b16 %v50
    %v72 = vunpack.c.l.b16 %v51
    %v73 = vunpack.c.h.b16 %v51
    %v74 = vunpack.c.l.b16 %v52
    %v75 = vunpack.c.h.b16 %v52
    %v76 = vunpack.c.l.b16 %v53
    %v77 = vunpack.c.h.b16 %v53
    %v78 = vpack.c.b16 %v64, %v62
    %v79 = vpack.c.b16 %v65, %v63
    %v80 = vpack.c.b16 %v68, %v66
    %v81 = vpack.c.b16 %v69, %v67
    %v82 = vpack.c.b16 %v72, %v70
    %v83 = vpack.c.b16 %v73, %v71
    %v84 = vpack.c.b16 %v76, %v74
    %v85 = vpack.c.b16 %v77, %v75
    %vm94 = vcmask 523264
    %v96 = vsel %vm94, %v45, 0
    %98 = vmatpush.bf16.msra.mxu0 0
    %99 = vmatpush.bf16.msra.mxu0 0
    %100 = vmatpush.bf16.msra.mxu0 0
    %101 = vmatpush.bf16.msra.mxu0 0
    %102 = vmatpush.bf16.msra.mxu0 %v84
    %103 = vmatpush.bf16.msra.mxu0 %v82
    %104 = vmatpush.bf16.msra.mxu0 %v80
    %105 = vmatpush.bf16.msra.mxu0 %v78
    %106 = vmatmul.bf16.gmra.mxu0 %v96
    %v107 = vpop.f32.mrf.mxu0
    %v108 = vadd.f32 0.0, %v107
    %v109 = vpop.f32.mrf.mxu0
    %v110 = vadd.f32 0.0, %v109
    %111 = vdwg.mxu0
    %112 = vmatpush.bf16.msra.mxu0 0
    %113 = vmatpush.bf16.msra.mxu0 0
    %114 = vmatpush.bf16.msra.mxu0 0
    %115 = vmatpush.bf16.msra.mxu0 0
    %116 = vmatpush.bf16.msra.mxu0 %v85
    %117 = vmatpush.bf16.msra.mxu0 %v83
    %118 = vmatpush.bf16.msra.mxu0 %v81
    %119 = vmatpush.bf16.msra.mxu0 %v79
    %120 = vmatmul.bf16.gmra.mxu0 %v96
    %v121 = vpop.f32.mrf.mxu0
    %v122 = vadd.f32 0.0, %v121
    %v123 = vpop.f32.mrf.mxu0
    %v124 = vadd.f32 0.0, %v123
    %125 = vdwg.mxu0
    %126 = vst [vmem:[#allocation5] sm:$0xff] %v108
    %127 = vst [vmem:[#allocation5 + $0x8] sm:$0xff] %v122
    %128 = vst [vmem:[#allocation5 + $0x10] sm:$0xff] %v110
    %129 = vst [vmem:[#allocation5 + $0x18] sm:$0xff] %v124
    // Predicated region
    $region14: #{tpu_custom_call.1} parent=1 // pred_check
      _
    $region15: #{tpu_custom_call.1} parent=1 // pred_check_branch
      %131 = sbr.rel (0) target = $region17
    $region16: #{tpu_custom_call.1} parent=1 // pred_region
      %133 = vsyncadd [#allocation4], 0
      %s134 = sshll.u32 [#allocation5], 4
      %s135 = int_to_ptr.vmem [resolvable:$true] %s134
      %s136 = sshll.u32 %s2, 4
      %s137 = int_to_ptr.hbm [resolvable:$true] %s136
      %142 = dma.vmem_to_hbm [thread:$0]  %s135, 512, %s137, [#allocation4], 256, 256, 16
    $region17: #{tpu_custom_call.1} parent=1 // pred_fallthru
      _
    // Predicated region
    $region18: #{tpu_custom_call.1} parent=1 // pred_check
      _
    $region19: #{tpu_custom_call.1} parent=1 // pred_check_branch
      %144 = sbr.rel (0) target = $region21
    $region20: #{tpu_custom_call.1} parent=1 // pred_region
      %146 = dma.done [#allocation4], 512
    $region21: #{tpu_custom_call.1} parent=1 // pred_fallthru
      _
    %147 = vsyncpa [#allocation3], 1
    %148 = vsyncpa [#allocation4], 1

</llo_original>
